<compile_context>
chip_gen: v7x
topology: tpu7x:2x2x1
jax: 0.10.0
libtpu: 0.0.40
codegen_flags: <defaults>
</compile_context>

<pallas_src>
import jax
import jax.numpy as jnp
from jax.experimental import pallas as pl
from jax.experimental.pallas import tpu as pltpu


ROW_PACK = 4  # batch rows packed per 128-lane output row (4 * user_size = 128 lanes)


# ---------------------------------------------------------------------------
# Kernel
# ---------------------------------------------------------------------------
def explainer_kernel(x_ref, w_in_ref, b_in_ref, w1_ref, b1_ref, w2_ref, b2_ref,
                     o_ref):
    # x_ref: (TBp, ROW_PACK * W_IN) bf16 packed inputs (4 samples per row).
    x = x_ref[...].astype(jnp.float32)

    # Fused users_fc + items_fc (block-diag weight) -> packed [user_out|item_out].
    combined = (jnp.dot(x, w_in_ref[...], preferred_element_type=jnp.float32)
                + b_in_ref[...])

    # bottleneck: Tanh -> Linear(2H->H) -> Tanh -> Linear(H->U) -> Sigmoid
    t = jnp.tanh(combined)
    h = jnp.tanh(jnp.dot(t, w1_ref[...], preferred_element_type=jnp.float32)
                 + b1_ref[...])
    logits = (jnp.dot(h, w2_ref[...], preferred_element_type=jnp.float32)
              + b2_ref[...])
    # sigmoid(x) == 0.5 * tanh(0.5 * x) + 0.5: one EUP op instead of exp+divide.
    o_ref[...] = 0.5 * jnp.tanh(0.5 * logits) + 0.5   # full-128-lane, unmasked store


# ---------------------------------------------------------------------------
# Parameter construction / one-time packing
# ---------------------------------------------------------------------------
def init_linear(key, in_features, out_features):
    """Deterministic PyTorch-style Linear init: U(-1/sqrt(fan_in), 1/sqrt(fan_in))."""
    kw, kb = jax.random.split(key)
    bound = 1.0 / jnp.sqrt(jnp.float32(in_features))
    w = jax.random.uniform(kw, (out_features, in_features), jnp.float32, -bound, bound)
    b = jax.random.uniform(kb, (out_features,), jnp.float32, -bound, bound)
    return w, b


def make_params(key, user_size, item_size, hidden_size):
    k1, k2, k3, k4 = jax.random.split(key, 4)
    wu, bu = init_linear(k1, user_size, hidden_size)           # users_fc
    wi, bi = init_linear(k2, item_size, hidden_size)           # items_fc
    w1, b1 = init_linear(k3, 2 * hidden_size, hidden_size)     # bottleneck Linear 1
    w2, b2 = init_linear(k4, hidden_size, user_size)           # bottleneck Linear 2
    return dict(wu=wu, bu=bu, wi=wi, bi=bi, w1=w1, b1=b1, w2=w2, b2=b2)


def prepare_packed_params(params, user_size, item_size, hidden_size):
    """One-time packing (hoisted out of the per-call hot path).

    Builds the fused first-layer weight (user block + item block on the
    "diagonal" of a (W_IN, 2H) matrix, zero rows for padding lanes) and then
    block-diagonal-replicates every layer ROW_PACK times so 4 samples can ride
    side by side in the lane dimension. Exact: the off-diagonal blocks are 0.
    """
    U, I, H = user_size, item_size, hidden_size
    W_IN = ((U + I + 31) // 32) * 32          # per-sample input width; 4*W_IN % 128 == 0

    w_fused = jnp.zeros((W_IN, 2 * H), jnp.float32)
    w_fused = w_fused.at[:U, :H].set(params["wu"].T)           # user half
    w_fused = w_fused.at[U:U + I, H:].set(params["wi"].T)      # item half
    b_fused = jnp.concatenate([params["bu"], params["bi"]])[None, :]   # (1, 2H)

    w1_t = params["w1"].T                     # (2H, H)
    w2_t = params["w2"].T                     # (H, U)

    def bdiag(w):
        di, do = w.shape
        out = jnp.zeros((ROW_PACK * di, ROW_PACK * do), w.dtype)
        for s in range(ROW_PACK):
            out = out.at[s * di:(s + 1) * di, s * do:(s + 1) * do].set(w)
        return out

    def btile(b):
        return jnp.tile(b, (1, ROW_PACK))

    return dict(
        w_in=bdiag(w_fused), b_in=btile(b_fused),
        w1=bdiag(w1_t),      b1=btile(params["b1"][None, :]),
        w2=bdiag(w2_t),      b2=btile(params["b2"][None, :]),
    )


# ---------------------------------------------------------------------------
# Generation-aware tiling hints
# ---------------------------------------------------------------------------
def _tpu_generation_hints():
    """Best-effort (max packed-row tile, min grid steps, vmem limit) for this TPU.

    Each packed row costs ~6 KiB of VMEM per step (double-buffered bf16 input
    block + double-buffered f32 output block + ~4 KiB of f32 intermediates).
    Unknown / v7x-like parts (64 MiB VMEM, 2 TensorCores): tiles up to ~4096
    rows (~24 MiB) and an even grid >= 2 so the parallel axis uses both cores.
    v5e / v6e (128 MiB VMEM, single TensorCore): tiles up to ~8192 rows and a
    single grid step is allowed (no megacore to feed).
    """
    max_tile_rows = 4096
    min_steps = 2
    vmem_limit = 48 * 1024 * 1024
    try:
        kind = jax.devices()[0].device_kind.lower()
    except Exception:
        kind = ""
    if any(tag in kind for tag in ("v5e", "v5 lite", "v5lite",
                                   "v6e", "v6 lite", "v6lite")):
        max_tile_rows = 8192
        min_steps = 1
        vmem_limit = 96 * 1024 * 1024
    return max_tile_rows, min_steps, vmem_limit


# ---------------------------------------------------------------------------
# Forward wrapper
# ---------------------------------------------------------------------------
def explainer_forward(user_tensor, item_tensor, packed):
    B, U_in = user_tensor.shape
    I = item_tensor.shape[1]

    W_IN = packed["w_in"].shape[0] // ROW_PACK      # per-sample padded input width
    OUT_pk = packed["w2"].shape[1]                  # ROW_PACK * user_size
    U = OUT_pk // ROW_PACK
    pad_cols = W_IN - U_in - I

    # Binary 0/1 interaction vectors are exact in bf16 -> halves input HBM bytes.
    # NOTE: exactness relies on the inputs being 0/1 (as the module is used);
    # switch this cast to float32 if non-binary features are ever fed in.
    x = jnp.concatenate(
        [user_tensor.astype(jnp.bfloat16),
         item_tensor.astype(jnp.bfloat16),
         jnp.zeros((B, pad_cols), jnp.bfloat16)], axis=-1)      # (B, W_IN)

    # ---- generation-aware tile / grid selection ---------------------------
    max_tile, min_steps, vmem_limit = _tpu_generation_hints()
    Bp = -(-B // ROW_PACK)                          # packed rows needed
    n_steps = max(1, -(-Bp // max_tile))            # steps needed to fit VMEM budget
    if min_steps == 2 and Bp >= 32:                 # multi-TC part: use both cores
        n_steps = max(n_steps, 2)
        n_steps += n_steps % 2                      # even step count -> balanced split
    tbp = ((-(-Bp // n_steps) + 15) // 16) * 16     # rows/step, multiple of 16 (bf16 tile)
    Bp_pad = n_steps * tbp
    B_pad = Bp_pad * ROW_PACK

    if B_pad != B:
        x = jnp.pad(x, ((0, B_pad - B), (0, 0)))
    x_pk = x.reshape(Bp_pad, ROW_PACK * W_IN)       # lane-dense packed input

    # ---- advisory cost estimate (kernel is microsecond-scale) -------------
    flops = 2 * Bp_pad * (packed["w_in"].shape[0] * packed["w_in"].shape[1]
                          + packed["w1"].shape[0] * packed["w1"].shape[1]
                          + packed["w2"].shape[0] * packed["w2"].shape[1])
    transcendentals = Bp_pad * (packed["w_in"].shape[1]       # tanh(combined)
                                + packed["w1"].shape[1]       # tanh(h)
                                + packed["w2"].shape[1])      # tanh-based sigmoid
    weight_bytes = sum(int(packed[k].size) * 4
                       for k in ("w_in", "b_in", "w1", "b1", "w2", "b2"))
    bytes_accessed = (Bp_pad * ROW_PACK * W_IN * 2        # bf16 input
                      + Bp_pad * OUT_pk * 4               # f32 output
                      + weight_bytes)

    moving = lambda shape: pl.BlockSpec(shape, lambda i: (i, 0))
    resident = lambda a: pl.BlockSpec(a.shape, lambda i: (0, 0))  # VMEM-resident weights

    out_pk = pl.pallas_call(
        explainer_kernel,
        out_shape=jax.ShapeDtypeStruct((Bp_pad, OUT_pk), jnp.float32),
        grid=(n_steps,),
        in_specs=[moving((tbp, ROW_PACK * W_IN)),
                  resident(packed["w_in"]), resident(packed["b_in"]),
                  resident(packed["w1"]), resident(packed["b1"]),
                  resident(packed["w2"]), resident(packed["b2"])],
        out_specs=moving((tbp, OUT_pk)),
        compiler_params=pltpu.CompilerParams(
            dimension_semantics=("parallel",),          # shards batch across TCs
            vmem_limit_bytes=vmem_limit),
        cost_estimate=pl.CostEstimate(
            flops=flops, transcendentals=transcendentals,
            bytes_accessed=bytes_accessed),
    )(x_pk, packed["w_in"], packed["b_in"], packed["w1"], packed["b1"],
      packed["w2"], packed["b2"])

    # NOTE: consumers that can accept the padded (B_pad, U) output should do
    # so to avoid this slice copy; kept here to match the module's interface.
    return out_pk.reshape(B_pad, U)[:B]


# ---------------------------------------------------------------------------
# Pure-JAX reference (mirrors the PyTorch forward exactly)
# ---------------------------------------------------------------------------
def explainer_reference(user_tensor, item_tensor, params):
    u = user_tensor.astype(jnp.float32)
    it = item_tensor.astype(jnp.float32)
    user_out = u @ params["wu"].T + params["bu"]
    item_out = it @ params["wi"].T + params["bi"]
    combined = jnp.concatenate([user_out, item_out], axis=-1)
    h = jnp.tanh(combined) @ params["w1"].T + params["b1"]
    h = jnp.tanh(h)
    logits = h @ params["w2"].T + params["b2"]
    return jax.nn.sigmoid(logits)


if __name__ == "__main__":
    USER_SIZE, ITEM_SIZE, HIDDEN, BATCH = 32, 24, 32, 1000   # non-multiple batch: tests padding

    key = jax.random.PRNGKey(0)
    kp, ku, ki = jax.random.split(key, 3)
    params = make_params(kp, USER_SIZE, ITEM_SIZE, HIDDEN)
    packed = prepare_packed_params(params, USER_SIZE, ITEM_SIZE, HIDDEN)  # one-time prep

    # Synthetic sparse-ish interaction vectors (module casts .float()).
    user_tensor = (jax.random.uniform(ku, (BATCH, USER_SIZE)) > 0.7).astype(jnp.float32)
    item_tensor = (jax.random.uniform(ki, (BATCH, ITEM_SIZE)) > 0.7).astype(jnp.float32)

    fwd = jax.jit(explainer_forward)
    out = jax.block_until_ready(fwd(user_tensor, item_tensor, packed))

    ref = explainer_reference(user_tensor, item_tensor, params)
    assert out.shape == (BATCH, USER_SIZE)
    assert jnp.allclose(out, ref, atol=1e-4, rtol=1e-4), "mismatch vs JAX reference"

    print("KERNEL_OK")
</pallas_src>

<mosaic_0001>
module attributes {stable_mosaic.version = 11 : i64} {
  func.func @explainer_kernel(%arg0: i32, %arg1: memref<128x256xbf16, #tpu.memory_space<vmem>>, %arg2: memref<256x256xf32, #tpu.memory_space<vmem>>, %arg3: memref<1x256xf32, #tpu.memory_space<vmem>>, %arg4: memref<256x128xf32, #tpu.memory_space<vmem>>, %arg5: memref<1x128xf32, #tpu.memory_space<vmem>>, %arg6: memref<128x128xf32, #tpu.memory_space<vmem>>, %arg7: memref<1x128xf32, #tpu.memory_space<vmem>>, %arg8: memref<128x128xf32, #tpu.memory_space<vmem>>) attributes {dimension_semantics = [#tpu.dimension_semantics<parallel>], iteration_bounds = array<i64: 2>, scalar_prefetch = 0 : i64, scratch_operands = 0 : i64, tpu.core_type = #tpu.core_type<tc>, window_params = [{transform_indices = @transform_0, window_bounds = array<i64: 128, 256>}, {pipeline_mode = #tpu.pipeline_mode<synchronous>, transform_indices = @transform_1, window_bounds = array<i64: 256, 256>}, {pipeline_mode = #tpu.pipeline_mode<synchronous>, transform_indices = @transform_2, window_bounds = array<i64: 1, 256>}, {pipeline_mode = #tpu.pipeline_mode<synchronous>, transform_indices = @transform_3, window_bounds = array<i64: 256, 128>}, {pipeline_mode = #tpu.pipeline_mode<synchronous>, transform_indices = @transform_4, window_bounds = array<i64: 1, 128>}, {pipeline_mode = #tpu.pipeline_mode<synchronous>, transform_indices = @transform_5, window_bounds = array<i64: 128, 128>}, {pipeline_mode = #tpu.pipeline_mode<synchronous>, transform_indices = @transform_6, window_bounds = array<i64: 1, 128>}, {transform_indices = @transform_7, window_bounds = array<i64: 128, 128>}]} {
    %c0 = arith.constant 0 : index
    %c0_0 = arith.constant 0 : index
    %0 = vector.load %arg1[%c0, %c0_0] : memref<128x256xbf16, #tpu.memory_space<vmem>>, vector<128x256xbf16>
    %1 = arith.extf %0 : vector<128x256xbf16> to vector<128x256xf32>
    %c0_1 = arith.constant 0 : index
    %c0_2 = arith.constant 0 : index
    %2 = vector.load %arg2[%c0_1, %c0_2] : memref<256x256xf32, #tpu.memory_space<vmem>>, vector<256x256xf32>
    %cst = arith.constant dense<0.000000e+00> : vector<128x256xf32>
    %3 = tpu.matmul %1, %2, %cst {dimension_numbers = #tpu.dot_dimension_numbers<[1], [0], [0], [1], [0, 0, 1, 1], [], []>} : vector<128x256xf32>, vector<256x256xf32>, vector<128x256xf32> -> vector<128x256xf32>
    %c0_3 = arith.constant 0 : index
    %c0_4 = arith.constant 0 : index
    %4 = vector.load %arg3[%c0_3, %c0_4] : memref<1x256xf32, #tpu.memory_space<vmem>>, vector<1x256xf32>
    %5 = vector.broadcast %4 : vector<1x256xf32> to vector<128x256xf32>
    %6 = arith.addf %3, %5 : vector<128x256xf32>
    %7 = math.tanh %6 : vector<128x256xf32>
    %c0_5 = arith.constant 0 : index
    %c0_6 = arith.constant 0 : index
    %8 = vector.load %arg4[%c0_5, %c0_6] : memref<256x128xf32, #tpu.memory_space<vmem>>, vector<256x128xf32>
    %cst_7 = arith.constant dense<0.000000e+00> : vector<128x128xf32>
    %9 = tpu.matmul %7, %8, %cst_7 {dimension_numbers = #tpu.dot_dimension_numbers<[1], [0], [0], [1], [0, 0, 1, 1], [], []>} : vector<128x256xf32>, vector<256x128xf32>, vector<128x128xf32> -> vector<128x128xf32>
    %c0_8 = arith.constant 0 : index
    %c0_9 = arith.constant 0 : index
    %10 = vector.load %arg5[%c0_8, %c0_9] : memref<1x128xf32, #tpu.memory_space<vmem>>, vector<1x128xf32>
    %11 = vector.broadcast %10 : vector<1x128xf32> to vector<128x128xf32>
    %12 = arith.addf %9, %11 : vector<128x128xf32>
    %13 = math.tanh %12 : vector<128x128xf32>
    %c0_10 = arith.constant 0 : index
    %c0_11 = arith.constant 0 : index
    %14 = vector.load %arg6[%c0_10, %c0_11] : memref<128x128xf32, #tpu.memory_space<vmem>>, vector<128x128xf32>
    %cst_12 = arith.constant dense<0.000000e+00> : vector<128x128xf32>
    %15 = tpu.matmul %13, %14, %cst_12 {dimension_numbers = #tpu.dot_dimension_numbers<[1], [0], [0], [1], [0, 0, 1, 1], [], []>} : vector<128x128xf32>, vector<128x128xf32>, vector<128x128xf32> -> vector<128x128xf32>
    %c0_13 = arith.constant 0 : index
    %c0_14 = arith.constant 0 : index
    %16 = vector.load %arg7[%c0_13, %c0_14] : memref<1x128xf32, #tpu.memory_space<vmem>>, vector<1x128xf32>
    %17 = vector.broadcast %16 : vector<1x128xf32> to vector<128x128xf32>
    %18 = arith.addf %15, %17 : vector<128x128xf32>
    %cst_15 = arith.constant 5.000000e-01 : f32
    %19 = vector.broadcast %cst_15 : f32 to vector<128x128xf32>
    %20 = arith.mulf %19, %18 : vector<128x128xf32>
    %21 = math.tanh %20 : vector<128x128xf32>
    %cst_16 = arith.constant 5.000000e-01 : f32
    %22 = vector.broadcast %cst_16 : f32 to vector<128x128xf32>
    %23 = arith.mulf %22, %21 : vector<128x128xf32>
    %cst_17 = arith.constant 5.000000e-01 : f32
    %24 = vector.broadcast %cst_17 : f32 to vector<128x128xf32>
    %25 = arith.addf %23, %24 : vector<128x128xf32>
    %c0_18 = arith.constant 0 : index
    %c0_19 = arith.constant 0 : index
    %26 = vector.load %arg8[%c0_18, %c0_19] : memref<128x128xf32, #tpu.memory_space<vmem>>, vector<128x128xf32>
    tpu.vector_store %arg8[%c0_18, %c0_19], %25 {strides = array<i32>} : memref<128x128xf32, #tpu.memory_space<vmem>>, vector<128x128xf32>,
    return
  }
  func.func @transform_0(%arg0: i32) -> (i32, i32) {
    %c0_i32 = arith.constant 0 : i32
    %c0_i32_0 = arith.constant 0 : i32
    return %arg0, %c0_i32 : i32, i32
  }
  func.func @transform_1(%arg0: i32) -> (i32, i32) {
    %c0_i32 = arith.constant 0 : i32
    %c0_i32_0 = arith.constant 0 : i32
    %c0_i32_1 = arith.constant 0 : i32
    return %c0_i32, %c0_i32_0 : i32, i32
  }
  func.func @transform_2(%arg0: i32) -> (i32, i32) {
    %c0_i32 = arith.constant 0 : i32
    %c0_i32_0 = arith.constant 0 : i32
    %c0_i32_1 = arith.constant 0 : i32
    return %c0_i32, %c0_i32_0 : i32, i32
  }
  func.func @transform_3(%arg0: i32) -> (i32, i32) {
    %c0_i32 = arith.constant 0 : i32
    %c0_i32_0 = arith.constant 0 : i32
    %c0_i32_1 = arith.constant 0 : i32
    return %c0_i32, %c0_i32_0 : i32, i32
  }
  func.func @transform_4(%arg0: i32) -> (i32, i32) {
    %c0_i32 = arith.constant 0 : i32
    %c0_i32_0 = arith.constant 0 : i32
    %c0_i32_1 = arith.constant 0 : i32
    return %c0_i32, %c0_i32_0 : i32, i32
  }
  func.func @transform_5(%arg0: i32) -> (i32, i32) {
    %c0_i32 = arith.constant 0 : i32
    %c0_i32_0 = arith.constant 0 : i32
    %c0_i32_1 = arith.constant 0 : i32
    return %c0_i32, %c0_i32_0 : i32, i32
  }
  func.func @transform_6(%arg0: i32) -> (i32, i32) {
    %c0_i32 = arith.constant 0 : i32
    %c0_i32_0 = arith.constant 0 : i32
    %c0_i32_1 = arith.constant 0 : i32
    return %c0_i32, %c0_i32_0 : i32, i32
  }
  func.func @transform_7(%arg0: i32) -> (i32, i32) {
    %c0_i32 = arith.constant 0 : i32
    %c0_i32_0 = arith.constant 0 : i32
    return %arg0, %c0_i32 : i32, i32
  }
}

</mosaic_0001>

<llo_original>
// kernel: explainer_forward.1
$region0: #{explainer_forward.1}
  #allocation0 [shape = 'u32[]', space=smem, size = 0x4, offset = 0x4, fixed_abs, tag = 'smem constant byte address 0x4 - core index']
  #allocation1 [shape = 'u32[144,128]{1,0:T(1,128)}', space=vmem, size = 0x12000, scoped, tag = 'internal scratch']
  %s0 = inlined_call_operand.vmem [shape: bf16[256,256], index: 0, kind: input, shape index: {}]
  %s1 = inlined_call_operand.vmem [shape: f32[256,256], index: 1, kind: input, shape index: {}]
  %s2 = inlined_call_operand.vmem [shape: f32[1,256], index: 2, kind: input, shape index: {}]
  %s3 = inlined_call_operand.vmem [shape: f32[256,128], index: 3, kind: input, shape index: {}]
  %s4 = inlined_call_operand.vmem [shape: f32[1,128], index: 4, kind: input, shape index: {}]
  %s5 = inlined_call_operand.vmem [shape: f32[128,128], index: 5, kind: input, shape index: {}]
  %s6 = inlined_call_operand.vmem [shape: f32[1,128], index: 6, kind: input, shape index: {}]
  %s7 = inlined_call_operand.vmem [shape: f32[256,128], index: 7, kind: output, shape index: {}]
  %s8 = sld [smem:[#allocation0]]
  $region61: #{explainer_forward.1} parent=0
    _
  %s10 = ssub.s32 1, %s8
  %s11 = scalar_select 0, %s10, %s8
  loop: start=0, step=1, limit=4
  $region2: #{explainer_forward.1} parent=0 // loop_pre_header
    _
  $region3: #{explainer_forward.1} parent=0 // loop_header
    %s13 = sphi 0, %s17
    %p14 = scmp.ge.s32.totalorder %s13, 4
    %s23 = sphi 0, %s25
    %s26 = sphi 0, %s23
    %s27 = sphi 0, %s26
    %s43 = sphi 0, %s27
    %s47 = sphi 0, %s47
    %s49 = sphi 0, %s47
    %s50 = sphi 0, %s49
    %s64 = sphi 0, %s50
    %s68 = sphi 0, %s68
    %s70 = sphi 0, %s68
    %s71 = sphi 0, %s70
    %s85 = sphi 0, %s71
    %s89 = sphi 0, %s89
    %s91 = sphi 0, %s89
    %s92 = sphi 0, %s91
    %s106 = sphi 0, %s92
    %s110 = sphi 0, %s110
    %s112 = sphi 0, %s110
    %s113 = sphi 0, %s112
    %s127 = sphi 0, %s113
    %s131 = sphi 0, %s131
    %s133 = sphi 0, %s131
    %s134 = sphi 0, %s133
    %s148 = sphi 0, %s134
    %s152 = sphi 0, %s152
    %s154 = sphi 0, %s152
    %s155 = sphi 0, %s154
    %s169 = sphi 0, %s155
    %s175 = sphi 0, %s177
    %s178 = sphi 0, %s175
    %s179 = sphi 0, %s178
    %s195 = sphi 0, %s179
  $region4: #{explainer_forward.1} parent=0 // loop_header_branch
    %16 = sbr.rel (%p14) target = $region8
  $region5: #{explainer_forward.1} parent=0 // loop_body
    %s18 = ssub.s32 %s13, 1
    %s19 = ssub.s32 %s13, 2
    %s20 = sadd.s32 %s13, 1
    %s21 = ssub.s32 %s13, %s20
    %p22 = scmp.eq.s32.totalorder %s21, 0
    %s24 = sadd.s32 %s23, 1
    %s25 = scalar_select %p22, %s23, %s24
    %p28 = pneg %p22
    %p29 = scmp.eq.s32.totalorder %s13, 1
    %p30 = por %p28, %p29
    %p31 = scmp.ne.s32.totalorder %s23, %s26
    %p32 = scmp.eq.s32.totalorder %s13, 0
    %p33 = por %p31, %p32
    %p34 = scmp.ne.s32.totalorder %s23, %s26
    %p35 = scmp.eq.s32.totalorder %s18, 1
    %p36 = por %p34, %p35
    %p37 = scmp.ne.s32.totalorder %s26, %s27
    %p38 = scmp.eq.s32.totalorder %s18, 0
    %p39 = por %p37, %p38
    %p40 = scmp.ne.s32.totalorder %s26, %s27
    %p41 = scmp.eq.s32.totalorder %s19, 1
    %p42 = por %p40, %p41
    %p44 = scmp.ne.s32.totalorder %s27, %s43
    %p45 = scmp.eq.s32.totalorder %s19, 0
    %p46 = por %p44, %p45
    %s48 = sadd.s32 %s47, 1
    %p51 = scmp.eq.s32.totalorder %s13, 1
    %p52 = scmp.ne.s32.totalorder %s47, %s49
    %p53 = scmp.eq.s32.totalorder %s13, 0
    %p54 = por %p52, %p53
    %p55 = scmp.ne.s32.totalorder %s47, %s49
    %p56 = scmp.eq.s32.totalorder %s18, 1
    %p57 = por %p55, %p56
    %p58 = scmp.ne.s32.totalorder %s49, %s50
    %p59 = scmp.eq.s32.totalorder %s18, 0
    %p60 = por %p58, %p59
    %p61 = scmp.ne.s32.totalorder %s49, %s50
    %p62 = scmp.eq.s32.totalorder %s19, 1
    %p63 = por %p61, %p62
    %p65 = scmp.ne.s32.totalorder %s50, %s64
    %p66 = scmp.eq.s32.totalorder %s19, 0
    %p67 = por %p65, %p66
    %s69 = sadd.s32 %s68, 1
    %p72 = scmp.eq.s32.totalorder %s13, 1
    %p73 = scmp.ne.s32.totalorder %s68, %s70
    %p74 = scmp.eq.s32.totalorder %s13, 0
    %p75 = por %p73, %p74
    %p76 = scmp.ne.s32.totalorder %s68, %s70
    %p77 = scmp.eq.s32.totalorder %s18, 1
    %p78 = por %p76, %p77
    %p79 = scmp.ne.s32.totalorder %s70, %s71
    %p80 = scmp.eq.s32.totalorder %s18, 0
    %p81 = por %p79, %p80
    %p82 = scmp.ne.s32.totalorder %s70, %s71
    %p83 = scmp.eq.s32.totalorder %s19, 1
    %p84 = por %p82, %p83
    %p86 = scmp.ne.s32.totalorder %s71, %s85
    %p87 = scmp.eq.s32.totalorder %s19, 0
    %p88 = por %p86, %p87
    %s90 = sadd.s32 %s89, 1
    %p93 = scmp.eq.s32.totalorder %s13, 1
    %p94 = scmp.ne.s32.totalorder %s89, %s91
    %p95 = scmp.eq.s32.totalorder %s13, 0
    %p96 = por %p94, %p95
    %p97 = scmp.ne.s32.totalorder %s89, %s91
    %p98 = scmp.eq.s32.totalorder %s18, 1
    %p99 = por %p97, %p98
    %p100 = scmp.ne.s32.totalorder %s91, %s92
    %p101 = scmp.eq.s32.totalorder %s18, 0
    %p102 = por %p100, %p101
    %p103 = scmp.ne.s32.totalorder %s91, %s92
    %p104 = scmp.eq.s32.totalorder %s19, 1
    %p105 = por %p103, %p104
    %p107 = scmp.ne.s32.totalorder %s92, %s106
    %p108 = scmp.eq.s32.totalorder %s19, 0
    %p109 = por %p107, %p108
    %s111 = sadd.s32 %s110, 1
    %p114 = scmp.eq.s32.totalorder %s13, 1
    %p115 = scmp.ne.s32.totalorder %s110, %s112
    %p116 = scmp.eq.s32.totalorder %s13, 0
    %p117 = por %p115, %p116
    %p118 = scmp.ne.s32.totalorder %s110, %s112
    %p119 = scmp.eq.s32.totalorder %s18, 1
    %p120 = por %p118, %p119
    %p121 = scmp.ne.s32.totalorder %s112, %s113
    %p122 = scmp.eq.s32.totalorder %s18, 0
    %p123 = por %p121, %p122
    %p124 = scmp.ne.s32.totalorder %s112, %s113
    %p125 = scmp.eq.s32.totalorder %s19, 1
    %p126 = por %p124, %p125
    %p128 = scmp.ne.s32.totalorder %s113, %s127
    %p129 = scmp.eq.s32.totalorder %s19, 0
    %p130 = por %p128, %p129
    %s132 = sadd.s32 %s131, 1
    %p135 = scmp.eq.s32.totalorder %s13, 1
    %p136 = scmp.ne.s32.totalorder %s131, %s133
    %p137 = scmp.eq.s32.totalorder %s13, 0
    %p138 = por %p136, %p137
    %p139 = scmp.ne.s32.totalorder %s131, %s133
    %p140 = scmp.eq.s32.totalorder %s18, 1
    %p141 = por %p139, %p140
    %p142 = scmp.ne.s32.totalorder %s133, %s134
    %p143 = scmp.eq.s32.totalorder %s18, 0
    %p144 = por %p142, %p143
    %p145 = scmp.ne.s32.totalorder %s133, %s134
    %p146 = scmp.eq.s32.totalorder %s19, 1
    %p147 = por %p145, %p146
    %p149 = scmp.ne.s32.totalorder %s134, %s148
    %p150 = scmp.eq.s32.totalorder %s19, 0
    %p151 = por %p149, %p150
    %s153 = sadd.s32 %s152, 1
    %p156 = scmp.eq.s32.totalorder %s13, 1
    %p157 = scmp.ne.s32.totalorder %s152, %s154
    %p158 = scmp.eq.s32.totalorder %s13, 0
    %p159 = por %p157, %p158
    %p160 = scmp.ne.s32.totalorder %s152, %s154
    %p161 = scmp.eq.s32.totalorder %s18, 1
    %p162 = por %p160, %p161
    %p163 = scmp.ne.s32.totalorder %s154, %s155
    %p164 = scmp.eq.s32.totalorder %s18, 0
    %p165 = por %p163, %p164
    %p166 = scmp.ne.s32.totalorder %s154, %s155
    %p167 = scmp.eq.s32.totalorder %s19, 1
    %p168 = por %p166, %p167
    %p170 = scmp.ne.s32.totalorder %s155, %s169
    %p171 = scmp.eq.s32.totalorder %s19, 0
    %p172 = por %p170, %p171
    %s173 = ssub.s32 %s13, %s20
    %p174 = scmp.eq.s32.totalorder %s173, 0
    %s176 = sadd.s32 %s175, 1
    %s177 = scalar_select %p174, %s175, %s176
    %p180 = pneg %p174
    %p181 = scmp.eq.s32.totalorder %s13, 1
    %p182 = por %p180, %p181
    %p183 = scmp.ne.s32.totalorder %s175, %s178
    %p184 = scmp.eq.s32.totalorder %s13, 0
    %p185 = por %p183, %p184
    %p186 = scmp.ne.s32.totalorder %s175, %s178
    %p187 = scmp.eq.s32.totalorder %s18, 1
    %p188 = por %p186, %p187
    %p189 = scmp.ne.s32.totalorder %s178, %s179
    %p190 = scmp.eq.s32.totalorder %s18, 0
    %p191 = por %p189, %p190
    %p192 = scmp.ne.s32.totalorder %s178, %s179
    %p193 = scmp.eq.s32.totalorder %s19, 1
    %p194 = por %p192, %p193
    %p196 = scmp.ne.s32.totalorder %s179, %s195
    %p197 = scmp.eq.s32.totalorder %s19, 0
    %p198 = por %p196, %p197
    %p199 = scmp.le.s32.totalorder 1, %s13
    %p200 = scmp.lt.s32.totalorder %s13, 3
    %p201 = pnand %p199, %p200
    %p202 = pneg %p201
    // Predicated region
    $region9: #{explainer_forward.1} parent=5 // pred_check
      _
    $region10: #{explainer_forward.1} parent=5 // pred_check_branch
      %204 = sbr.rel (%p201) target = $region12
    $region11: #{explainer_forward.1} parent=5 // pred_region
      %s205 = ssub.s32 %s13, 1
      // Predicated region
      $region13: #{explainer_forward.1} parent=11 // pred_check
        %p206 = pneg %p60
      $region14: #{explainer_forward.1} parent=11 // pred_check_branch
        %208 = sbr.rel (%p206) target = $region16
      $region15: #{explainer_forward.1} parent=11 // pred_region
        _
      $region16: #{explainer_forward.1} parent=11 // pred_fallthru
        _
      // Predicated region
      $region17: #{explainer_forward.1} parent=11 // pred_check
        %p209 = pneg %p81
      $region18: #{explainer_forward.1} parent=11 // pred_check_branch
        %211 = sbr.rel (%p209) target = $region20
      $region19: #{explainer_forward.1} parent=11 // pred_region
        _
      $region20: #{explainer_forward.1} parent=11 // pred_fallthru
        _
      // Predicated region
      $region21: #{explainer_forward.1} parent=11 // pred_check
        %p212 = pneg %p102
      $region22: #{explainer_forward.1} parent=11 // pred_check_branch
        %214 = sbr.rel (%p212) target = $region24
      $region23: #{explainer_forward.1} parent=11 // pred_region
        _
      $region24: #{explainer_forward.1} parent=11 // pred_fallthru
        _
      // Predicated region
      $region25: #{explainer_forward.1} parent=11 // pred_check
        %p215 = pneg %p123
      $region26: #{explainer_forward.1} parent=11 // pred_check_branch
        %217 = sbr.rel (%p215) target = $region28
      $region27: #{explainer_forward.1} parent=11 // pred_region
        _
      $region28: #{explainer_forward.1} parent=11 // pred_fallthru
        _
      // Predicated region
      $region29: #{explainer_forward.1} parent=11 // pred_check
        %p218 = pneg %p144
      $region30: #{explainer_forward.1} parent=11 // pred_check_branch
        %220 = sbr.rel (%p218) target = $region32
      $region31: #{explainer_forward.1} parent=11 // pred_region
        _
      $region32: #{explainer_forward.1} parent=11 // pred_fallthru
        _
      // Predicated region
      $region33: #{explainer_forward.1} parent=11 // pred_check
        %p221 = pneg %p165
      $region34: #{explainer_forward.1} parent=11 // pred_check_branch
        %223 = sbr.rel (%p221) target = $region36
      $region35: #{explainer_forward.1} parent=11 // pred_region
        _
      $region36: #{explainer_forward.1} parent=11 // pred_fallthru
        _
    $region12: #{explainer_forward.1} parent=5 // pred_fallthru
      _
    %p224 = scmp.lt.s32.totalorder %s13, 2
    // Predicated region
    $region37: #{explainer_forward.1} parent=5 // pred_check
      %p225 = pneg %p224
    $region38: #{explainer_forward.1} parent=5 // pred_check_branch
      %227 = sbr.rel (%p225) target = $region40
    $region39: #{explainer_forward.1} parent=5 // pred_region
      // Predicated region
      $region41: #{explainer_forward.1} parent=39 // pred_check
        %p228 = pneg %p33
      $region42: #{explainer_forward.1} parent=39 // pred_check_branch
        %230 = sbr.rel (%p228) target = $region44
      $region43: #{explainer_forward.1} parent=39 // pred_region
        %s231 = smul.u32 16, %s13
        %p232 = scmp.lt.s32.totalorder %s231, 31
        %s233 = scalar_select %p232, %s231, 31
        %s234 = smul.addr %s233, 2
        %s235 = smul.addr %s234, 4
        %s236 = scalar_lea.vmem %s0, %s235
        %s237 = smul.u32 16, %s13
      $region44: #{explainer_forward.1} parent=39 // pred_fallthru
        _
    $region40: #{explainer_forward.1} parent=5 // pred_fallthru
      _
    %p238 = scmp.le.s32.totalorder 1, %s13
    %p239 = scmp.lt.s32.totalorder %s13, 3
    %p240 = pnand %p238, %p239
    %p241 = pneg %p240
    // Predicated region
    $region45: #{explainer_forward.1} parent=5 // pred_check
      _
    $region46: #{explainer_forward.1} parent=5 // pred_check_branch
      %243 = sbr.rel (%p240) target = $region48
    $region47: #{explainer_forward.1} parent=5 // pred_region
      %s244 = ssub.s32 %s13, 1
      %s245 = smul.u32 16, %s18
      %p246 = scmp.lt.s32.totalorder %s245, 31
      %s247 = scalar_select %p246, %s245, 31
      %s248 = smul.addr %s247, 2
      %s249 = smul.addr %s248, 4
      %s250 = scalar_lea.vmem %s0, %s249
      %p251 = pneg %p39
      %p252 = pneg %p36
      %p253 = pneg %p60
      %p254 = pneg %p57
      %p255 = pneg %p81
      %p256 = pneg %p78
      %p257 = pneg %p102
      %p258 = pneg %p99
      %p259 = pneg %p123
      %p260 = pneg %p120
      %p261 = pneg %p144
      %p262 = pneg %p141
      %p263 = pneg %p165
      %p264 = pneg %p162
      %p265 = pneg %p191
      %p266 = pneg %p188
      %s267 = smul.u32 16, %s18
      %p268 = scmp.lt.s32.totalorder %s267, 31
      %s269 = scalar_select %p268, %s267, 31
      %s270 = smul.addr %s269, 8
      %s271 = scalar_lea.vmem %s7, %s270
      %s272 = smul.u32 16, %s18
      %p273 = scmp.lt.s32.totalorder %s272, 31
      %s274 = scalar_select %p273, %s272, 31
      %s275 = smul.addr %s274, 2
      %s276 = smul.addr %s275, 4
      %s277 = scalar_lea.vmem %s0, %s276
      %s278 = smul.u32 16, %s18
      %s279 = smul.u32 16, %s18
      %p280 = scmp.lt.s32.totalorder %s279, 31
      %s281 = scalar_select %p280, %s279, 31
      %s282 = smul.addr %s281, 8
      %s283 = scalar_lea.vmem %s7, %s282
      %s284 = smul.u32 16, %s18
      %v285 = vld [vmem:[%s277] sm:$0xff]
      %v286 = vld [vmem:[%s277 + $0x8] sm:$0xff]
      %v287 = vld [vmem:[%s277 + $0x10] sm:$0xff]
      %v288 = vld [vmem:[%s277 + $0x18] sm:$0xff]
      %v289 = vld [vmem:[%s277 + $0x20] sm:$0xff]
      %v290 = vld [vmem:[%s277 + $0x28] sm:$0xff]
      %v291 = vld [vmem:[%s277 + $0x30] sm:$0xff]
      %v292 = vld [vmem:[%s277 + $0x38] sm:$0xff]
      %v293 = vld [vmem:[%s277 + $0x40] sm:$0xff]
      %v294 = vld [vmem:[%s277 + $0x48] sm:$0xff]
      %v295 = vld [vmem:[%s277 + $0x50] sm:$0xff]
      %v296 = vld [vmem:[%s277 + $0x58] sm:$0xff]
      %v297 = vld [vmem:[%s277 + $0x60] sm:$0xff]
      %v298 = vld [vmem:[%s277 + $0x68] sm:$0xff]
      %v299 = vld [vmem:[%s277 + $0x70] sm:$0xff]
      %v300 = vld [vmem:[%s277 + $0x78] sm:$0xff]
      %v301 = vunpack.c.l.bf16 %v285
      %v302 = vunpack.c.h.bf16 %v285
      %v303 = vunpack.c.l.bf16 %v286
      %v304 = vunpack.c.h.bf16 %v286
      %v305 = vunpack.c.l.bf16 %v287
      %v306 = vunpack.c.h.bf16 %v287
      %v307 = vunpack.c.l.bf16 %v288
      %v308 = vunpack.c.h.bf16 %v288
      %v309 = vunpack.c.l.bf16 %v289
      %v310 = vunpack.c.h.bf16 %v289
      %v311 = vunpack.c.l.bf16 %v290
      %v312 = vunpack.c.h.bf16 %v290
      %v313 = vunpack.c.l.bf16 %v291
      %v314 = vunpack.c.h.bf16 %v291
      %v315 = vunpack.c.l.bf16 %v292
      %v316 = vunpack.c.h.bf16 %v292
      %v317 = vunpack.c.l.bf16 %v293
      %v318 = vunpack.c.h.bf16 %v293
      %v319 = vunpack.c.l.bf16 %v294
      %v320 = vunpack.c.h.bf16 %v294
      %v321 = vunpack.c.l.bf16 %v295
      %v322 = vunpack.c.h.bf16 %v295
      %v323 = vunpack.c.l.bf16 %v296
      %v324 = vunpack.c.h.bf16 %v296
      %v325 = vunpack.c.l.bf16 %v297
      %v326 = vunpack.c.h.bf16 %v297
      %v327 = vunpack.c.l.bf16 %v298
      %v328 = vunpack.c.h.bf16 %v298
      %v329 = vunpack.c.l.bf16 %v299
      %v330 = vunpack.c.h.bf16 %v299
      %v331 = vunpack.c.l.bf16 %v300
      %v332 = vunpack.c.h.bf16 %v300
      %v333 = vld [vmem:[%s1] sm:$0xff]
      %v334 = vld [vmem:[%s1 + $0x8] sm:$0xff]
      %v335 = vld [vmem:[%s1 + $0x10] sm:$0xff]
      %v336 = vld [vmem:[%s1 + $0x18] sm:$0xff]
      %v337 = vld [vmem:[%s1 + $0x20] sm:$0xff]
      %v338 = vld [vmem:[%s1 + $0x28] sm:$0xff]
      %v339 = vld [vmem:[%s1 + $0x30] sm:$0xff]
      %v340 = vld [vmem:[%s1 + $0x38] sm:$0xff]
      %v341 = vld [vmem:[%s1 + $0x40] sm:$0xff]
      %v342 = vld [vmem:[%s1 + $0x48] sm:$0xff]
      %v343 = vld [vmem:[%s1 + $0x50] sm:$0xff]
      %v344 = vld [vmem:[%s1 + $0x58] sm:$0xff]
      %v345 = vld [vmem:[%s1 + $0x60] sm:$0xff]
      %v346 = vld [vmem:[%s1 + $0x68] sm:$0xff]
      %v347 = vld [vmem:[%s1 + $0x70] sm:$0xff]
      %v348 = vld [vmem:[%s1 + $0x78] sm:$0xff]
      %v349 = vld [vmem:[%s1 + $0x80] sm:$0xff]
      %v350 = vld [vmem:[%s1 + $0x88] sm:$0xff]
      %v351 = vld [vmem:[%s1 + $0x90] sm:$0xff]
      %v352 = vld [vmem:[%s1 + $0x98] sm:$0xff]
      %v353 = vld [vmem:[%s1 + $0xa0] sm:$0xff]
      %v354 = vld [vmem:[%s1 + $0xa8] sm:$0xff]
      %v355 = vld [vmem:[%s1 + $0xb0] sm:$0xff]
      %v356 = vld [vmem:[%s1 + $0xb8] sm:$0xff]
      %v357 = vld [vmem:[%s1 + $0xc0] sm:$0xff]
      %v358 = vld [vmem:[%s1 + $0xc8] sm:$0xff]
      %v359 = vld [vmem:[%s1 + $0xd0] sm:$0xff]
      %v360 = vld [vmem:[%s1 + $0xd8] sm:$0xff]
      %v361 = vld [vmem:[%s1 + $0xe0] sm:$0xff]
      %v362 = vld [vmem:[%s1 + $0xe8] sm:$0xff]
      %v363 = vld [vmem:[%s1 + $0xf0] sm:$0xff]
      %v364 = vld [vmem:[%s1 + $0xf8] sm:$0xff]
      %v365 = vld [vmem:[%s1 + $0x100] sm:$0xff]
      %v366 = vld [vmem:[%s1 + $0x108] sm:$0xff]
      %v367 = vld [vmem:[%s1 + $0x110] sm:$0xff]
      %v368 = vld [vmem:[%s1 + $0x118] sm:$0xff]
      %v369 = vld [vmem:[%s1 + $0x120] sm:$0xff]
      %v370 = vld [vmem:[%s1 + $0x128] sm:$0xff]
      %v371 = vld [vmem:[%s1 + $0x130] sm:$0xff]
      %v372 = vld [vmem:[%s1 + $0x138] sm:$0xff]
      %v373 = vld [vmem:[%s1 + $0x140] sm:$0xff]
      %v374 = vld [vmem:[%s1 + $0x148] sm:$0xff]
      %v375 = vld [vmem:[%s1 + $0x150] sm:$0xff]
      %v376 = vld [vmem:[%s1 + $0x158] sm:$0xff]
      %v377 = vld [vmem:[%s1 + $0x160] sm:$0xff]
      %v378 = vld [vmem:[%s1 + $0x168] sm:$0xff]
      %v379 = vld [vmem:[%s1 + $0x170] sm:$0xff]
      %v380 = vld [vmem:[%s1 + $0x178] sm:$0xff]
      %v381 = vld [vmem:[%s1 + $0x180] sm:$0xff]
      %v382 = vld [vmem:[%s1 + $0x188] sm:$0xff]
      %v383 = vld [vmem:[%s1 + $0x190] sm:$0xff]
      %v384 = vld [vmem:[%s1 + $0x198] sm:$0xff]
      %v385 = vld [vmem:[%s1 + $0x1a0] sm:$0xff]
      %v386 = vld [vmem:[%s1 + $0x1a8] sm:$0xff]
      %v387 = vld [vmem:[%s1 + $0x1b0] sm:$0xff]
      %v388 = vld [vmem:[%s1 + $0x1b8] sm:$0xff]
      %v389 = vld [vmem:[%s1 + $0x1c0] sm:$0xff]
      %v390 = vld [vmem:[%s1 + $0x1c8] sm:$0xff]
      %v391 = vld [vmem:[%s1 + $0x1d0] sm:$0xff]
      %v392 = vld [vmem:[%s1 + $0x1d8] sm:$0xff]
      %v393 = vld [vmem:[%s1 + $0x1e0] sm:$0xff]
      %v394 = vld [vmem:[%s1 + $0x1e8] sm:$0xff]
      %v395 = vld [vmem:[%s1 + $0x1f0] sm:$0xff]
      %v396 = vld [vmem:[%s1 + $0x1f8] sm:$0xff]
      %v397 = vld [vmem:[%s2] sm:$0x3]
      %v399 = vlaneseq
      %v400 = vshrl.u32 %v399, 7
      %v401 = vsub.s32 0, %v400
      %v402 = vrot.slane %v397, %v401
      %v403 = vlaneseq
      %v404 = vshrl.u32 %v403, 7
      %v405 = vsub.s32 1, %v404
      %v406 = vrot.slane %v397, %v405
      %409 = vmatprep.subr.mxu0 %v334
      %410 = vmatpush1.msra.mxu0 %v333
      %411 = vmatprep.subr.mxu0 %v336
      %412 = vmatpush1.msra.mxu0 %v335
      %413 = vmatprep.subr.mxu0 %v338
      %414 = vmatpush1.msra.mxu0 %v337
      %415 = vmatprep.subr.mxu0 %v340
      %416 = vmatpush1.msra.mxu0 %v339
      %417 = vmatprep.subr.mxu0 %v342
      %418 = vmatpush1.msra.mxu0 %v341
      %419 = vmatprep.subr.mxu0 %v344
      %420 = vmatpush1.msra.mxu0 %v343
      %421 = vmatprep.subr.mxu0 %v346
      %422 = vmatpush1.msra.mxu0 %v345
      %423 = vmatprep.subr.mxu0 %v348
      %424 = vmatpush1.msra.mxu0 %v347
      %425 = vmatprep.subr.mxu0 %v350
      %426 = vmatpush1.msra.mxu0 %v349
      %427 = vmatprep.subr.mxu0 %v352
      %428 = vmatpush1.msra.mxu0 %v351
      %429 = vmatprep.subr.mxu0 %v354
      %430 = vmatpush1.msra.mxu0 %v353
      %431 = vmatprep.subr.mxu0 %v356
      %432 = vmatpush1.msra.mxu0 %v355
      %433 = vmatprep.subr.mxu0 %v358
      %434 = vmatpush1.msra.mxu0 %v357
      %435 = vmatprep.subr.mxu0 %v360
      %436 = vmatpush1.msra.mxu0 %v359
      %437 = vmatprep.subr.mxu0 %v362
      %438 = vmatpush1.msra.mxu0 %v361
      %439 = vmatprep.subr.mxu0 %v364
      %440 = vmatpush1.msra.mxu0 %v363
      %441 = vmatprep.subr.mxu0 %v366
      %442 = vmatpush1.msra.mxu0 %v365
      %443 = vmatprep.subr.mxu0 %v368
      %444 = vmatpush1.msra.mxu0 %v367
      %445 = vmatprep.subr.mxu0 %v370
      %446 = vmatpush1.msra.mxu0 %v369
      %447 = vmatprep.subr.mxu0 %v372
      %448 = vmatpush1.msra.mxu0 %v371
      %449 = vmatprep.subr.mxu0 %v374
      %450 = vmatpush1.msra.mxu0 %v373
      %451 = vmatprep.subr.mxu0 %v376
      %452 = vmatpush1.msra.mxu0 %v375
      %453 = vmatprep.subr.mxu0 %v378
      %454 = vmatpush1.msra.mxu0 %v377
      %455 = vmatprep.subr.mxu0 %v380
      %456 = vmatpush1.msra.mxu0 %v379
      %457 = vmatprep.subr.mxu0 %v382
      %458 = vmatpush1.msra.mxu0 %v381
      %459 = vmatprep.subr.mxu0 %v384
      %460 = vmatpush1.msra.mxu0 %v383
      %461 = vmatprep.subr.mxu0 %v386
      %462 = vmatpush1.msra.mxu0 %v385
      %463 = vmatprep.subr.mxu0 %v388
      %464 = vmatpush1.msra.mxu0 %v387
      %465 = vmatprep.subr.mxu0 %v390
      %466 = vmatpush1.msra.mxu0 %v389
      %467 = vmatprep.subr.mxu0 %v392
      %468 = vmatpush1.msra.mxu0 %v391
      %469 = vmatprep.subr.mxu0 %v394
      %470 = vmatpush1.msra.mxu0 %v393
      %471 = vmatprep.subr.mxu0 %v396
      %472 = vmatpush1.msra.mxu0 %v395
      %473 = vmatprep.mubr.f32.mxu0 %v302
      %474 = vmatmul.mubr.f32.gmra.mrb[0].mxu0 %v301
      %v475 = vpop.f32.mrb[0].mxu0
      %v476 = vadd.f32 %v402, %v475
      %v477 = vpop.f32.mrb[0].mxu0
      %v478 = vadd.f32 %v406, %v477
      %479 = vmatprep.mubr.f32.mxu0 %v304
      %480 = vmatmul.mubr.f32.gmra.mrb[0].mxu0 %v303
      %v481 = vpop.f32.mrb[0].mxu0
      %v482 = vadd.f32 %v402, %v481
      %v483 = vpop.f32.mrb[0].mxu0
      %v484 = vadd.f32 %v406, %v483
      %485 = vmatprep.mubr.f32.mxu0 %v306
      %486 = vmatmul.mubr.f32.gmra.mrb[0].mxu0 %v305
      %v487 = vpop.f32.mrb[0].mxu0
      %v488 = vadd.f32 %v402, %v487
      %v489 = vpop.f32.mrb[0].mxu0
      %v490 = vadd.f32 %v406, %v489
      %491 = vmatprep.mubr.f32.mxu0 %v308
      %492 = vmatmul.mubr.f32.gmra.mrb[0].mxu0 %v307
      %v493 = vpop.f32.mrb[0].mxu0
      %v494 = vadd.f32 %v402, %v493
      %v495 = vpop.f32.mrb[0].mxu0
      %v496 = vadd.f32 %v406, %v495
      %497 = vmatprep.mubr.f32.mxu0 %v310
      %498 = vmatmul.mubr.f32.gmra.mrb[0].mxu0 %v309
      %v499 = vpop.f32.mrb[0].mxu0
      %v500 = vadd.f32 %v402, %v499
      %v501 = vpop.f32.mrb[0].mxu0
      %v502 = vadd.f32 %v406, %v501
      %503 = vmatprep.mubr.f32.mxu0 %v312
      %504 = vmatmul.mubr.f32.gmra.mrb[0].mxu0 %v311
      %v505 = vpop.f32.mrb[0].mxu0
      %v506 = vadd.f32 %v402, %v505
      %v507 = vpop.f32.mrb[0].mxu0
      %v508 = vadd.f32 %v406, %v507
      %509 = vmatprep.mubr.f32.mxu0 %v314
      %510 = vmatmul.mubr.f32.gmra.mrb[0].mxu0 %v313
      %v511 = vpop.f32.mrb[0].mxu0
      %v512 = vadd.f32 %v402, %v511
      %v513 = vpop.f32.mrb[0].mxu0
      %v514 = vadd.f32 %v406, %v513
      %515 = vmatprep.mubr.f32.mxu0 %v316
      %516 = vmatmul.mubr.f32.gmra.mrb[0].mxu0 %v315
      %v517 = vpop.f32.mrb[0].mxu0
      %v518 = vadd.f32 %v402, %v517
      %v519 = vpop.f32.mrb[0].mxu0
      %v520 = vadd.f32 %v406, %v519
      %521 = vmatprep.mubr.f32.mxu0 %v318
      %522 = vmatmul.mubr.f32.gmra.mrb[0].mxu0 %v317
      %v523 = vpop.f32.mrb[0].mxu0
      %v524 = vadd.f32 %v402, %v523
      %v525 = vpop.f32.mrb[0].mxu0
      %v526 = vadd.f32 %v406, %v525
      %527 = vmatprep.mubr.f32.mxu0 %v320
      %528 = vmatmul.mubr.f32.gmra.mrb[0].mxu0 %v319
      %v529 = vpop.f32.mrb[0].mxu0
      %v530 = vadd.f32 %v402, %v529
      %v531 = vpop.f32.mrb[0].mxu0
      %v532 = vadd.f32 %v406, %v531
      %533 = vmatprep.mubr.f32.mxu0 %v322
      %534 = vmatmul.mubr.f32.gmra.mrb[0].mxu0 %v321
      %v535 = vpop.f32.mrb[0].mxu0
      %v536 = vadd.f32 %v402, %v535
      %v537 = vpop.f32.mrb[0].mxu0
      %v538 = vadd.f32 %v406, %v537
      %539 = vmatprep.mubr.f32.mxu0 %v324
      %540 = vmatmul.mubr.f32.gmra.mrb[0].mxu0 %v323
      %v541 = vpop.f32.mrb[0].mxu0
      %v542 = vadd.f32 %v402, %v541
      %v543 = vpop.f32.mrb[0].mxu0
      %v544 = vadd.f32 %v406, %v543
      %545 = vmatprep.mubr.f32.mxu0 %v326
      %546 = vmatmul.mubr.f32.gmra.mrb[0].mxu0 %v325
      %v547 = vpop.f32.mrb[0].mxu0
      %v548 = vadd.f32 %v402, %v547
      %v549 = vpop.f32.mrb[0].mxu0
      %v550 = vadd.f32 %v406, %v549
      %551 = vmatprep.mubr.f32.mxu0 %v328
      %552 = vmatmul.mubr.f32.gmra.mrb[0].mxu0 %v327
      %v553 = vpop.f32.mrb[0].mxu0
      %v554 = vadd.f32 %v402, %v553
      %v555 = vpop.f32.mrb[0].mxu0
      %v556 = vadd.f32 %v406, %v555
      %557 = vmatprep.mubr.f32.mxu0 %v330
      %558 = vmatmul.mubr.f32.gmra.mrb[0].mxu0 %v329
      %v559 = vpop.f32.mrb[0].mxu0
      %v560 = vadd.f32 %v402, %v559
      %v561 = vpop.f32.mrb[0].mxu0
      %v562 = vadd.f32 %v406, %v561
      %563 = vmatprep.mubr.f32.mxu0 %v332
      %564 = vmatmul.mubr.f32.gmra.mrb[0].mxu0 %v331
      %v565 = vpop.f32.mrb[0].mxu0
      %v566 = vadd.f32 %v402, %v565
      %v567 = vpop.f32.mrb[0].mxu0
      %v568 = vadd.f32 %v406, %v567
      %569 = vdwg.mxu0
      %v570 = vtanh.pop %v476
      %v571 = vtanh.pop %v478
      %v572 = vtanh.pop %v482
      %v573 = vtanh.pop %v484
      %v574 = vtanh.pop %v488
      %v575 = vtanh.pop %v490
      %v576 = vtanh.pop %v494
      %v577 = vtanh.pop %v496
      %v578 = vtanh.pop %v500
      %v579 = vtanh.pop %v502
      %v580 = vtanh.pop %v506
      %v581 = vtanh.pop %v508
      %v582 = vtanh.pop %v512
      %v583 = vtanh.pop %v514
      %v584 = vtanh.pop %v518
      %v585 = vtanh.pop %v520
      %v586 = vtanh.pop %v524
      %v587 = vtanh.pop %v526
      %v588 = vtanh.pop %v530
      %v589 = vtanh.pop %v532
      %v590 = vtanh.pop %v536
      %v591 = vtanh.pop %v538
      %v592 = vtanh.pop %v542
      %v593 = vtanh.pop %v544
      %v594 = vtanh.pop %v548
      %v595 = vtanh.pop %v550
      %v596 = vtanh.pop %v554
      %v597 = vtanh.pop %v556
      %v598 = vtanh.pop %v560
      %v599 = vtanh.pop %v562
      %v600 = vtanh.pop %v566
      %v601 = vtanh.pop %v568
      %v602 = vld [vmem:[%s3] sm:$0xff]
      %v603 = vld [vmem:[%s3 + $0x8] sm:$0xff]
      %v604 = vld [vmem:[%s3 + $0x10] sm:$0xff]
      %v605 = vld [vmem:[%s3 + $0x18] sm:$0xff]
      %v606 = vld [vmem:[%s3 + $0x20] sm:$0xff]
      %v607 = vld [vmem:[%s3 + $0x28] sm:$0xff]
      %v608 = vld [vmem:[%s3 + $0x30] sm:$0xff]
      %v609 = vld [vmem:[%s3 + $0x38] sm:$0xff]
      %v610 = vld [vmem:[%s3 + $0x40] sm:$0xff]
      %v611 = vld [vmem:[%s3 + $0x48] sm:$0xff]
      %v612 = vld [vmem:[%s3 + $0x50] sm:$0xff]
      %v613 = vld [vmem:[%s3 + $0x58] sm:$0xff]
      %v614 = vld [vmem:[%s3 + $0x60] sm:$0xff]
      %v615 = vld [vmem:[%s3 + $0x68] sm:$0xff]
      %v616 = vld [vmem:[%s3 + $0x70] sm:$0xff]
      %v617 = vld [vmem:[%s3 + $0x78] sm:$0xff]
      %v618 = vld [vmem:[%s3 + $0x80] sm:$0xff]
      %v619 = vld [vmem:[%s3 + $0x88] sm:$0xff]
      %v620 = vld [vmem:[%s3 + $0x90] sm:$0xff]
      %v621 = vld [vmem:[%s3 + $0x98] sm:$0xff]
      %v622 = vld [vmem:[%s3 + $0xa0] sm:$0xff]
      %v623 = vld [vmem:[%s3 + $0xa8] sm:$0xff]
      %v624 = vld [vmem:[%s3 + $0xb0] sm:$0xff]
      %v625 = vld [vmem:[%s3 + $0xb8] sm:$0xff]
      %v626 = vld [vmem:[%s3 + $0xc0] sm:$0xff]
      %v627 = vld [vmem:[%s3 + $0xc8] sm:$0xff]
      %v628 = vld [vmem:[%s3 + $0xd0] sm:$0xff]
      %v629 = vld [vmem:[%s3 + $0xd8] sm:$0xff]
      %v630 = vld [vmem:[%s3 + $0xe0] sm:$0xff]
      %v631 = vld [vmem:[%s3 + $0xe8] sm:$0xff]
      %v632 = vld [vmem:[%s3 + $0xf0] sm:$0xff]
      %v633 = vld [vmem:[%s3 + $0xf8] sm:$0xff]
      %v634 = vld [vmem:[%s4] sm:$0x1]
      %v636 = vlaneseq
      %v637 = vshrl.u32 %v636, 7
      %v638 = vsub.s32 0, %v637
      %v639 = vrot.slane %v634, %v638
      %641 = vmatprep.subr.mxu0 0.0
      %642 = vmatpush1.msra.mxu0 %v602
      %643 = vmatprep.subr.mxu0 0.0
      %644 = vmatpush1.msra.mxu0 %v603
      %645 = vmatprep.subr.mxu0 0.0
      %646 = vmatpush1.msra.mxu0 %v604
      %647 = vmatprep.subr.mxu0 0.0
      %648 = vmatpush1.msra.mxu0 %v605
      %649 = vmatprep.subr.mxu0 0.0
      %650 = vmatpush1.msra.mxu0 %v606
      %651 = vmatprep.subr.mxu0 0.0
      %652 = vmatpush1.msra.mxu0 %v607
      %653 = vmatprep.subr.mxu0 0.0
      %654 = vmatpush1.msra.mxu0 %v608
      %655 = vmatprep.subr.mxu0 0.0
      %656 = vmatpush1.msra.mxu0 %v609
      %657 = vmatprep.subr.mxu0 0.0
      %658 = vmatpush1.msra.mxu0 %v610
      %659 = vmatprep.subr.mxu0 0.0
      %660 = vmatpush1.msra.mxu0 %v611
      %661 = vmatprep.subr.mxu0 0.0
      %662 = vmatpush1.msra.mxu0 %v612
      %663 = vmatprep.subr.mxu0 0.0
      %664 = vmatpush1.msra.mxu0 %v613
      %665 = vmatprep.subr.mxu0 0.0
      %666 = vmatpush1.msra.mxu0 %v614
      %667 = vmatprep.subr.mxu0 0.0
      %668 = vmatpush1.msra.mxu0 %v615
      %669 = vmatprep.subr.mxu0 0.0
      %670 = vmatpush1.msra.mxu0 %v616
      %671 = vmatprep.subr.mxu0 0.0
      %672 = vmatpush1.msra.mxu0 %v617
      %673 = vmatprep.subr.mxu0 0.0
      %674 = vmatpush1.msra.mxu0 %v618
      %675 = vmatprep.subr.mxu0 0.0
      %676 = vmatpush1.msra.mxu0 %v619
      %677 = vmatprep.subr.mxu0 0.0
      %678 = vmatpush1.msra.mxu0 %v620
      %679 = vmatprep.subr.mxu0 0.0
      %680 = vmatpush1.msra.mxu0 %v621
      %681 = vmatprep.subr.mxu0 0.0
      %682 = vmatpush1.msra.mxu0 %v622
      %683 = vmatprep.subr.mxu0 0.0
      %684 = vmatpush1.msra.mxu0 %v623
      %685 = vmatprep.subr.mxu0 0.0
      %686 = vmatpush1.msra.mxu0 %v624
      %687 = vmatprep.subr.mxu0 0.0
      %688 = vmatpush1.msra.mxu0 %v625
      %689 = vmatprep.subr.mxu0 0.0
      %690 = vmatpush1.msra.mxu0 %v626
      %691 = vmatprep.subr.mxu0 0.0
      %692 = vmatpush1.msra.mxu0 %v627
      %693 = vmatprep.subr.mxu0 0.0
      %694 = vmatpush1.msra.mxu0 %v628
      %695 = vmatprep.subr.mxu0 0.0
      %696 = vmatpush1.msra.mxu0 %v629
      %697 = vmatprep.subr.mxu0 0.0
      %698 = vmatpush1.msra.mxu0 %v630
      %699 = vmatprep.subr.mxu0 0.0
      %700 = vmatpush1.msra.mxu0 %v631
      %701 = vmatprep.subr.mxu0 0.0
      %702 = vmatpush1.msra.mxu0 %v632
      %703 = vmatprep.subr.mxu0 0.0
      %704 = vmatpush1.msra.mxu0 %v633
      %705 = vmatprep.mubr.f32.mxu0 %v571
      %706 = vmatmul.mubr.f32.gmra.mrb[0].mxu0 %v570
      %v707 = vpop.f32.mrb[0].mxu0
      %v708 = vadd.f32 %v639, %v707
      %v709 = vpop.f32.mrb[0].mxu0
      %710 = vmatprep.mubr.f32.mxu0 %v573
      %711 = vmatmul.mubr.f32.gmra.mrb[0].mxu0 %v572
      %v712 = vpop.f32.mrb[0].mxu0
      %v713 = vadd.f32 %v639, %v712
      %v714 = vpop.f32.mrb[0].mxu0
      %715 = vmatprep.mubr.f32.mxu0 %v575
      %716 = vmatmul.mubr.f32.gmra.mrb[0].mxu0 %v574
      %v717 = vpop.f32.mrb[0].mxu0
      %v718 = vadd.f32 %v639, %v717
      %v719 = vpop.f32.mrb[0].mxu0
      %720 = vmatprep.mubr.f32.mxu0 %v577
      %721 = vmatmul.mubr.f32.gmra.mrb[0].mxu0 %v576
      %v722 = vpop.f32.mrb[0].mxu0
      %v723 = vadd.f32 %v639, %v722
      %v724 = vpop.f32.mrb[0].mxu0
      %725 = vmatprep.mubr.f32.mxu0 %v579
      %726 = vmatmul.mubr.f32.gmra.mrb[0].mxu0 %v578
      %v727 = vpop.f32.mrb[0].mxu0
      %v728 = vadd.f32 %v639, %v727
      %v729 = vpop.f32.mrb[0].mxu0
      %730 = vmatprep.mubr.f32.mxu0 %v581
      %731 = vmatmul.mubr.f32.gmra.mrb[0].mxu0 %v580
      %v732 = vpop.f32.mrb[0].mxu0
      %v733 = vadd.f32 %v639, %v732
      %v734 = vpop.f32.mrb[0].mxu0
      %735 = vmatprep.mubr.f32.mxu0 %v583
      %736 = vmatmul.mubr.f32.gmra.mrb[0].mxu0 %v582
      %v737 = vpop.f32.mrb[0].mxu0
      %v738 = vadd.f32 %v639, %v737
      %v739 = vpop.f32.mrb[0].mxu0
      %740 = vmatprep.mubr.f32.mxu0 %v585
      %741 = vmatmul.mubr.f32.gmra.mrb[0].mxu0 %v584
      %v742 = vpop.f32.mrb[0].mxu0
      %v743 = vadd.f32 %v639, %v742
      %v744 = vpop.f32.mrb[0].mxu0
      %745 = vmatprep.mubr.f32.mxu0 %v587
      %746 = vmatmul.mubr.f32.gmra.mrb[0].mxu0 %v586
      %v747 = vpop.f32.mrb[0].mxu0
      %v748 = vadd.f32 %v639, %v747
      %v749 = vpop.f32.mrb[0].mxu0
      %750 = vmatprep.mubr.f32.mxu0 %v589
      %751 = vmatmul.mubr.f32.gmra.mrb[0].mxu0 %v588
      %v752 = vpop.f32.mrb[0].mxu0
      %v753 = vadd.f32 %v639, %v752
      %v754 = vpop.f32.mrb[0].mxu0
      %755 = vmatprep.mubr.f32.mxu0 %v591
      %756 = vmatmul.mubr.f32.gmra.mrb[0].mxu0 %v590
      %v757 = vpop.f32.mrb[0].mxu0
      %v758 = vadd.f32 %v639, %v757
      %v759 = vpop.f32.mrb[0].mxu0
      %760 = vmatprep.mubr.f32.mxu0 %v593
      %761 = vmatmul.mubr.f32.gmra.mrb[0].mxu0 %v592
      %v762 = vpop.f32.mrb[0].mxu0
      %v763 = vadd.f32 %v639, %v762
      %v764 = vpop.f32.mrb[0].mxu0
      %765 = vmatprep.mubr.f32.mxu0 %v595
      %766 = vmatmul.mubr.f32.gmra.mrb[0].mxu0 %v594
      %v767 = vpop.f32.mrb[0].mxu0
      %v768 = vadd.f32 %v639, %v767
      %v769 = vpop.f32.mrb[0].mxu0
      %770 = vmatprep.mubr.f32.mxu0 %v597
      %771 = vmatmul.mubr.f32.gmra.mrb[0].mxu0 %v596
      %v772 = vpop.f32.mrb[0].mxu0
      %v773 = vadd.f32 %v639, %v772
      %v774 = vpop.f32.mrb[0].mxu0
      %775 = vmatprep.mubr.f32.mxu0 %v599
      %776 = vmatmul.mubr.f32.gmra.mrb[0].mxu0 %v598
      %v777 = vpop.f32.mrb[0].mxu0
      %v778 = vadd.f32 %v639, %v777
      %v779 = vpop.f32.mrb[0].mxu0
      %780 = vmatprep.mubr.f32.mxu0 %v601
      %781 = vmatmul.mubr.f32.gmra.mrb[0].mxu0 %v600
      %v782 = vpop.f32.mrb[0].mxu0
      %v783 = vadd.f32 %v639, %v782
      %v784 = vpop.f32.mrb[0].mxu0
      %785 = vdwg.mxu0
      %v786 = vtanh.pop %v708
      %v787 = vtanh.pop %v713
      %v788 = vtanh.pop %v718
      %v789 = vtanh.pop %v723
      %v790 = vtanh.pop %v728
      %v791 = vtanh.pop %v733
      %v792 = vtanh.pop %v738
      %v793 = vtanh.pop %v743
      %v794 = vtanh.pop %v748
      %v795 = vtanh.pop %v753
      %v796 = vtanh.pop %v758
      %v797 = vtanh.pop %v763
      %v798 = vtanh.pop %v768
      %v799 = vtanh.pop %v773
      %v800 = vtanh.pop %v778
      %v801 = vtanh.pop %v783
      %v802 = vld [vmem:[%s5] sm:$0xff]
      %v803 = vld [vmem:[%s5 + $0x8] sm:$0xff]
      %v804 = vld [vmem:[%s5 + $0x10] sm:$0xff]
      %v805 = vld [vmem:[%s5 + $0x18] sm:$0xff]
      %v806 = vld [vmem:[%s5 + $0x20] sm:$0xff]
      %v807 = vld [vmem:[%s5 + $0x28] sm:$0xff]
      %v808 = vld [vmem:[%s5 + $0x30] sm:$0xff]
      %v809 = vld [vmem:[%s5 + $0x38] sm:$0xff]
      %v810 = vld [vmem:[%s5 + $0x40] sm:$0xff]
      %v811 = vld [vmem:[%s5 + $0x48] sm:$0xff]
      %v812 = vld [vmem:[%s5 + $0x50] sm:$0xff]
      %v813 = vld [vmem:[%s5 + $0x58] sm:$0xff]
      %v814 = vld [vmem:[%s5 + $0x60] sm:$0xff]
      %v815 = vld [vmem:[%s5 + $0x68] sm:$0xff]
      %v816 = vld [vmem:[%s5 + $0x70] sm:$0xff]
      %v817 = vld [vmem:[%s5 + $0x78] sm:$0xff]
      %v818 = vld [vmem:[%s6] sm:$0x1]
      %v820 = vlaneseq
      %v821 = vshrl.u32 %v820, 7
      %v822 = vsub.s32 0, %v821
      %v823 = vrot.slane %v818, %v822
      %825 = vmatprep.subr.mxu0 0.0
      %826 = vmatpush1.msra.mxu0 %v802
      %827 = vmatprep.subr.mxu0 0.0
      %828 = vmatpush1.msra.mxu0 %v803
      %829 = vmatprep.subr.mxu0 0.0
      %830 = vmatpush1.msra.mxu0 %v804
      %831 = vmatprep.subr.mxu0 0.0
      %832 = vmatpush1.msra.mxu0 %v805
      %833 = vmatprep.subr.mxu0 0.0
      %834 = vmatpush1.msra.mxu0 %v806
      %835 = vmatprep.subr.mxu0 0.0
      %836 = vmatpush1.msra.mxu0 %v807
      %837 = vmatprep.subr.mxu0 0.0
      %838 = vmatpush1.msra.mxu0 %v808
      %839 = vmatprep.subr.mxu0 0.0
      %840 = vmatpush1.msra.mxu0 %v809
      %841 = vmatprep.subr.mxu0 0.0
      %842 = vmatpush1.msra.mxu0 %v810
      %843 = vmatprep.subr.mxu0 0.0
      %844 = vmatpush1.msra.mxu0 %v811
      %845 = vmatprep.subr.mxu0 0.0
      %846 = vmatpush1.msra.mxu0 %v812
      %847 = vmatprep.subr.mxu0 0.0
      %848 = vmatpush1.msra.mxu0 %v813
      %849 = vmatprep.subr.mxu0 0.0
      %850 = vmatpush1.msra.mxu0 %v814
      %851 = vmatprep.subr.mxu0 0.0
      %852 = vmatpush1.msra.mxu0 %v815
      %853 = vmatprep.subr.mxu0 0.0
      %854 = vmatpush1.msra.mxu0 %v816
      %855 = vmatprep.subr.mxu0 0.0
      %856 = vmatpush1.msra.mxu0 %v817
      %857 = vmatprep.subr.mxu0 0.0
      %858 = vmatpush1.msra.mxu0 0.0
      %859 = vmatprep.subr.mxu0 0.0
      %860 = vmatpush1.msra.mxu0 0.0
      %861 = vmatprep.subr.mxu0 0.0
      %862 = vmatpush1.msra.mxu0 0.0
      %863 = vmatprep.subr.mxu0 0.0
      %864 = vmatpush1.msra.mxu0 0.0
      %865 = vmatprep.subr.mxu0 0.0
      %866 = vmatpush1.msra.mxu0 0.0
      %867 = vmatprep.subr.mxu0 0.0
      %868 = vmatpush1.msra.mxu0 0.0
      %869 = vmatprep.subr.mxu0 0.0
      %870 = vmatpush1.msra.mxu0 0.0
      %871 = vmatprep.subr.mxu0 0.0
      %872 = vmatpush1.msra.mxu0 0.0
      %873 = vmatprep.subr.mxu0 0.0
      %874 = vmatpush1.msra.mxu0 0.0
      %875 = vmatprep.subr.mxu0 0.0
      %876 = vmatpush1.msra.mxu0 0.0
      %877 = vmatprep.subr.mxu0 0.0
      %878 = vmatpush1.msra.mxu0 0.0
      %879 = vmatprep.subr.mxu0 0.0
      %880 = vmatpush1.msra.mxu0 0.0
      %881 = vmatprep.subr.mxu0 0.0
      %882 = vmatpush1.msra.mxu0 0.0
      %883 = vmatprep.subr.mxu0 0.0
      %884 = vmatpush1.msra.mxu0 0.0
      %885 = vmatprep.subr.mxu0 0.0
      %886 = vmatpush1.msra.mxu0 0.0
      %887 = vmatprep.subr.mxu0 0.0
      %888 = vmatpush1.msra.mxu0 0.0
      %889 = vmatprep.mubr.f32.mxu0 0.0
      %890 = vmatmul.mubr.f32.gmra.mrb[0].mxu0 %v786
      %v891 = vpop.f32.mrb[0].mxu0
      %v892 = vadd.f32 %v823, %v891
      %v893 = vpop.f32.mrb[0].mxu0
      %894 = vmatprep.mubr.f32.mxu0 0.0
      %895 = vmatmul.mubr.f32.gmra.mrb[0].mxu0 %v787
      %v896 = vpop.f32.mrb[0].mxu0
      %v897 = vadd.f32 %v823, %v896
      %v898 = vpop.f32.mrb[0].mxu0
      %899 = vmatprep.mubr.f32.mxu0 0.0
      %900 = vmatmul.mubr.f32.gmra.mrb[0].mxu0 %v788
      %v901 = vpop.f32.mrb[0].mxu0
      %v902 = vadd.f32 %v823, %v901
      %v903 = vpop.f32.mrb[0].mxu0
      %904 = vmatprep.mubr.f32.mxu0 0.0
      %905 = vmatmul.mubr.f32.gmra.mrb[0].mxu0 %v789
      %v906 = vpop.f32.mrb[0].mxu0
      %v907 = vadd.f32 %v823, %v906
      %v908 = vpop.f32.mrb[0].mxu0
      %909 = vmatprep.mubr.f32.mxu0 0.0
      %910 = vmatmul.mubr.f32.gmra.mrb[0].mxu0 %v790
      %v911 = vpop.f32.mrb[0].mxu0
      %v912 = vadd.f32 %v823, %v911
      %v913 = vpop.f32.mrb[0].mxu0
      %914 = vmatprep.mubr.f32.mxu0 0.0
      %915 = vmatmul.mubr.f32.gmra.mrb[0].mxu0 %v791
      %v916 = vpop.f32.mrb[0].mxu0
      %v917 = vadd.f32 %v823, %v916
      %v918 = vpop.f32.mrb[0].mxu0
      %919 = vmatprep.mubr.f32.mxu0 0.0
      %920 = vmatmul.mubr.f32.gmra.mrb[0].mxu0 %v792
      %v921 = vpop.f32.mrb[0].mxu0
      %v922 = vadd.f32 %v823, %v921
      %v923 = vpop.f32.mrb[0].mxu0
      %924 = vmatprep.mubr.f32.mxu0 0.0
      %925 = vmatmul.mubr.f32.gmra.mrb[0].mxu0 %v793
      %v926 = vpop.f32.mrb[0].mxu0
      %v927 = vadd.f32 %v823, %v926
      %v928 = vpop.f32.mrb[0].mxu0
      %929 = vmatprep.mubr.f32.mxu0 0.0
      %930 = vmatmul.mubr.f32.gmra.mrb[0].mxu0 %v794
      %v931 = vpop.f32.mrb[0].mxu0
      %v932 = vadd.f32 %v823, %v931
      %v933 = vpop.f32.mrb[0].mxu0
      %934 = vmatprep.mubr.f32.mxu0 0.0
      %935 = vmatmul.mubr.f32.gmra.mrb[0].mxu0 %v795
      %v936 = vpop.f32.mrb[0].mxu0
      %v937 = vadd.f32 %v823, %v936
      %v938 = vpop.f32.mrb[0].mxu0
      %939 = vmatprep.mubr.f32.mxu0 0.0
      %940 = vmatmul.mubr.f32.gmra.mrb[0].mxu0 %v796
      %v941 = vpop.f32.mrb[0].mxu0
      %v942 = vadd.f32 %v823, %v941
      %v943 = vpop.f32.mrb[0].mxu0
      %944 = vmatprep.mubr.f32.mxu0 0.0
      %945 = vmatmul.mubr.f32.gmra.mrb[0].mxu0 %v797
      %v946 = vpop.f32.mrb[0].mxu0
      %v947 = vadd.f32 %v823, %v946
      %v948 = vpop.f32.mrb[0].mxu0
      %949 = vmatprep.mubr.f32.mxu0 0.0
      %950 = vmatmul.mubr.f32.gmra.mrb[0].mxu0 %v798
      %v951 = vpop.f32.mrb[0].mxu0
      %v952 = vadd.f32 %v823, %v951
      %v953 = vpop.f32.mrb[0].mxu0
      %954 = vmatprep.mubr.f32.mxu0 0.0
      %955 = vmatmul.mubr.f32.gmra.mrb[0].mxu0 %v799
      %v956 = vpop.f32.mrb[0].mxu0
      %v957 = vadd.f32 %v823, %v956
      %v958 = vpop.f32.mrb[0].mxu0
      %959 = vmatprep.mubr.f32.mxu0 0.0
      %960 = vmatmul.mubr.f32.gmra.mrb[0].mxu0 %v800
      %v961 = vpop.f32.mrb[0].mxu0
      %v962 = vadd.f32 %v823, %v961
      %v963 = vpop.f32.mrb[0].mxu0
      %964 = vmatprep.mubr.f32.mxu0 0.0
      %965 = vmatmul.mubr.f32.gmra.mrb[0].mxu0 %v801
      %v966 = vpop.f32.mrb[0].mxu0
      %v967 = vadd.f32 %v823, %v966
      %v968 = vpop.f32.mrb[0].mxu0
      %969 = vdwg.mxu0
      %v970 = vmul.f32 %v892, 0.5
      %v971 = vmul.f32 %v897, 0.5
      %v972 = vmul.f32 %v902, 0.5
      %v973 = vmul.f32 %v907, 0.5
      %v974 = vmul.f32 %v912, 0.5
      %v975 = vmul.f32 %v917, 0.5
      %v976 = vmul.f32 %v922, 0.5
      %v977 = vmul.f32 %v927, 0.5
      %v978 = vmul.f32 %v932, 0.5
      %v979 = vmul.f32 %v937, 0.5
      %v980 = vmul.f32 %v942, 0.5
      %v981 = vmul.f32 %v947, 0.5
      %v982 = vmul.f32 %v952, 0.5
      %v983 = vmul.f32 %v957, 0.5
      %v984 = vmul.f32 %v962, 0.5
      %v985 = vmul.f32 %v967, 0.5
      %v986 = vtanh.pop %v970
      %v987 = vtanh.pop %v971
      %v988 = vtanh.pop %v972
      %v989 = vtanh.pop %v973
      %v990 = vtanh.pop %v974
      %v991 = vtanh.pop %v975
      %v992 = vtanh.pop %v976
      %v993 = vtanh.pop %v977
      %v994 = vtanh.pop %v978
      %v995 = vtanh.pop %v979
      %v996 = vtanh.pop %v980
      %v997 = vtanh.pop %v981
      %v998 = vtanh.pop %v982
      %v999 = vtanh.pop %v983
      %v1000 = vtanh.pop %v984
      %v1001 = vtanh.pop %v985
      %v1002 = vmul.f32 %v986, 0.5
      %v1003 = vmul.f32 %v987, 0.5
      %v1004 = vmul.f32 %v988, 0.5
      %v1005 = vmul.f32 %v989, 0.5
      %v1006 = vmul.f32 %v990, 0.5
      %v1007 = vmul.f32 %v991, 0.5
      %v1008 = vmul.f32 %v992, 0.5
      %v1009 = vmul.f32 %v993, 0.5
      %v1010 = vmul.f32 %v994, 0.5
      %v1011 = vmul.f32 %v995, 0.5
      %v1012 = vmul.f32 %v996, 0.5
      %v1013 = vmul.f32 %v997, 0.5
      %v1014 = vmul.f32 %v998, 0.5
      %v1015 = vmul.f32 %v999, 0.5
      %v1016 = vmul.f32 %v1000, 0.5
      %v1017 = vmul.f32 %v1001, 0.5
      %v1018 = vadd.f32 %v1002, 0.5
      %v1019 = vadd.f32 %v1003, 0.5
      %v1020 = vadd.f32 %v1004, 0.5
      %v1021 = vadd.f32 %v1005, 0.5
      %v1022 = vadd.f32 %v1006, 0.5
      %v1023 = vadd.f32 %v1007, 0.5
      %v1024 = vadd.f32 %v1008, 0.5
      %v1025 = vadd.f32 %v1009, 0.5
      %v1026 = vadd.f32 %v1010, 0.5
      %v1027 = vadd.f32 %v1011, 0.5
      %v1028 = vadd.f32 %v1012, 0.5
      %v1029 = vadd.f32 %v1013, 0.5
      %v1030 = vadd.f32 %v1014, 0.5
      %v1031 = vadd.f32 %v1015, 0.5
      %v1032 = vadd.f32 %v1016, 0.5
      %v1033 = vadd.f32 %v1017, 0.5
      %1034 = vst [vmem:[%s283] sm:$0xff] %v1018
      %1035 = vst [vmem:[%s283 + $0x8] sm:$0xff] %v1019
      %1036 = vst [vmem:[%s283 + $0x10] sm:$0xff] %v1020
      %1037 = vst [vmem:[%s283 + $0x18] sm:$0xff] %v1021
      %1038 = vst [vmem:[%s283 + $0x20] sm:$0xff] %v1022
      %1039 = vst [vmem:[%s283 + $0x28] sm:$0xff] %v1023
      %1040 = vst [vmem:[%s283 + $0x30] sm:$0xff] %v1024
      %1041 = vst [vmem:[%s283 + $0x38] sm:$0xff] %v1025
      %1042 = vst [vmem:[%s283 + $0x40] sm:$0xff] %v1026
      %1043 = vst [vmem:[%s283 + $0x48] sm:$0xff] %v1027
      %1044 = vst [vmem:[%s283 + $0x50] sm:$0xff] %v1028
      %1045 = vst [vmem:[%s283 + $0x58] sm:$0xff] %v1029
      %1046 = vst [vmem:[%s283 + $0x60] sm:$0xff] %v1030
      %1047 = vst [vmem:[%s283 + $0x68] sm:$0xff] %v1031
      %1048 = vst [vmem:[%s283 + $0x70] sm:$0xff] %v1032
      %1049 = vst [vmem:[%s283 + $0x78] sm:$0xff] %v1033
      %s1050 = smul.u32 16, %s18
      %p1051 = scmp.lt.s32.totalorder %s1050, 31
      %s1052 = scalar_select %p1051, %s1050, 31
      %s1053 = smul.addr %s1052, 8
      %s1054 = scalar_lea.vmem %s7, %s1053
      // Predicated region
      $region49: #{explainer_forward.1} parent=47 // pred_check
        %p1055 = pneg %p188
      $region50: #{explainer_forward.1} parent=47 // pred_check_branch
        %1057 = sbr.rel (%p1055) target = $region52
      $region51: #{explainer_forward.1} parent=47 // pred_region
        %s1058 = smul.u32 16, %s18
      $region52: #{explainer_forward.1} parent=47 // pred_fallthru
        _
    $region48: #{explainer_forward.1} parent=5 // pred_fallthru
      _
    %p1059 = scmp.le.s32.totalorder 2, %s13
    // Predicated region
    $region53: #{explainer_forward.1} parent=5 // pred_check
      %p1060 = pneg %p1059
    $region54: #{explainer_forward.1} parent=5 // pred_check_branch
      %1062 = sbr.rel (%p1060) target = $region56
    $region55: #{explainer_forward.1} parent=5 // pred_region
      %s1063 = ssub.s32 %s13, 2
      // Predicated region
      $region57: #{explainer_forward.1} parent=55 // pred_check
        %p1064 = pneg %p194
      $region58: #{explainer_forward.1} parent=55 // pred_check_branch
        %1066 = sbr.rel (%p1064) target = $region60
      $region59: #{explainer_forward.1} parent=55 // pred_region
        %s1067 = smul.u32 16, %s19
        %p1068 = scmp.lt.s32.totalorder %s1067, 31
        %s1069 = scalar_select %p1068, %s1067, 31
        %s1070 = smul.addr %s1069, 8
        %s1071 = scalar_lea.vmem %s7, %s1070
      $region60: #{explainer_forward.1} parent=55 // pred_fallthru
        _
    $region56: #{explainer_forward.1} parent=5 // pred_fallthru
      _
  $region6: #{explainer_forward.1} parent=0 // loop_footer
    %s17 = sadd.s32 1, %s13
  $region7: #{explainer_forward.1} parent=0 // loop_footer_branch
    %12 = sbr.rel target = $region3
  $region8: #{explainer_forward.1} parent=0 // loop_exit
    _

</llo_original>
